<compile_context>
chip_gen: v5e
topology: v5e:2x2
jax: 0.10.0
libtpu: 0.0.40
codegen_flags: <defaults>
</compile_context>

<pallas_src>
import jax
import jax.numpy as jnp
from jax.experimental import pallas as pl
from jax.experimental.pallas import tpu as pltpu

HIDDEN = 64  # width fixed by the module definition (nn.Linear(..., 64))


def critic_kernel(s_ref, a_ref, w1s_ref, w1a_ref, b1_ref,
                  w2_ref, b2_ref, w3_ref, b3_ref, o_ref):
    # fc1 with the concat fused: x @ w1 == state @ w1_state + action @ w1_action.
    # Inputs arrive f32 from HBM; cast to the bf16 weight dtype here (VPU work
    # hidden under the tile DMA) instead of in a separate wrapper pass.
    s = s_ref[...].astype(w1s_ref.dtype)
    a = a_ref[...].astype(w1a_ref.dtype)
    h1 = (jnp.dot(s, w1s_ref[...], preferred_element_type=jnp.float32)
          + jnp.dot(a, w1a_ref[...], preferred_element_type=jnp.float32)
          + b1_ref[...])
    h1 = jnp.maximum(h1, 0.0).astype(w2_ref.dtype)          # ReLU, back to bf16 for MXU

    # fc2
    h2 = jnp.dot(h1, w2_ref[...], preferred_element_type=jnp.float32) + b2_ref[...]
    h2 = jnp.maximum(h2, 0.0)

    # fc3: N=1 output -> VPU broadcast-mul + lane reduction (skip the MXU).
    # w3 is a (1, HIDDEN) f32 row; b3 is an SMEM scalar.
    q = jnp.sum(h2 * w3_ref[...], axis=-1, keepdims=True) + b3_ref[0]
    o_ref[...] = q.astype(o_ref.dtype)


def _round_up_8(n):
    return max(8, ((n + 7) // 8) * 8)


def _vmem_budget_bytes():
    """~0.75x the per-core VMEM capacity; conservative 64 MiB fallback (v7x)."""
    cap = 64 * 1024 * 1024
    try:
        info = pltpu.get_tpu_info()
        cap = int(getattr(info, "vmem_capacity_bytes", cap))
    except Exception:
        pass
    return (3 * cap) // 4


def _pick_tm(batch, state_dim, action_dim, budget_bytes):
    """Largest multiple-of-8 batch tile (<=2048) whose working set fits the
    VMEM budget: double-buffered f32 state/action tiles + f32 output tile +
    f32 activations + (conservatively double-buffered) resident bf16 weights.
    Also caps the tile so the batch grid has >=2 steps when B >= 16, letting
    the 'parallel' axis shard across both v7x TensorCores."""
    weight_bytes = 2 * ((state_dim + action_dim) * HIDDEN * 2   # w1s + w1a (bf16)
                        + HIDDEN * HIDDEN * 2                    # w2 (bf16)
                        + 3 * HIDDEN * 4 + 4)                    # b1, b2, w3, b3 (f32)
    headroom = 4 * 1024 * 1024                                   # compiler scratch / sems
    avail = max(budget_bytes - weight_bytes - headroom, 1 * 1024 * 1024)

    per_row = (2 * (state_dim + action_dim) * 4   # double-buffered f32 input tiles
               + 2 * 4                            # double-buffered f32 output column
               + 3 * HIDDEN * 4)                  # h1/h2/q f32 intermediates (slack)

    tm = min(2048, _round_up_8(batch))
    if batch >= 16:
        tm = min(tm, _round_up_8(pl.cdiv(batch, 2)))   # guarantee >=2 grid steps
    while tm > 8 and tm * per_row > avail:
        tm //= 2
    return _round_up_8((tm // 8) * 8)


def critic_forward(state, action, params):
    """state: [B, C, H, W] float32, action: [B, A] float32 -> q: [B, 1] float32."""
    w1s, w1a, b1, w2, b2, w3, b3 = params
    state_dim = w1s.shape[0]
    action_dim = w1a.shape[0]

    B = state.shape[0]
    state_flat = state.reshape(B, -1)                 # torch: state.view(B, -1); no copy, no cast
    assert state_flat.shape[1] == state_dim and action.shape[1] == action_dim

    budget = _vmem_budget_bytes()
    tm = _pick_tm(B, state_dim, action_dim, budget)
    grid = (pl.cdiv(B, tm),)

    # Weights / biases: same block every grid step -> VMEM-resident.
    rep = lambda shape: pl.BlockSpec(shape, lambda i: (0, 0))

    out = pl.pallas_call(
        critic_kernel,
        out_shape=jax.ShapeDtypeStruct((B, 1), jnp.float32),
        grid=grid,
        in_specs=[
            pl.BlockSpec((tm, state_dim), lambda i: (i, 0)),   # state tile (pipelined, f32)
            pl.BlockSpec((tm, action_dim), lambda i: (i, 0)),  # action tile (pipelined, f32)
            rep((state_dim, HIDDEN)),                          # w1_state (bf16)
            rep((action_dim, HIDDEN)),                         # w1_action (bf16)
            rep((1, HIDDEN)),                                  # b1 (f32)
            rep((HIDDEN, HIDDEN)),                             # w2 (bf16)
            rep((1, HIDDEN)),                                  # b2 (f32)
            rep((1, HIDDEN)),                                  # w3 row (f32)
            pl.BlockSpec(memory_space=pltpu.MemorySpace.SMEM), # b3 scalar (f32, SMEM)
        ],
        out_specs=pl.BlockSpec((tm, 1), lambda i: (i, 0)),
        compiler_params=pltpu.CompilerParams(
            dimension_semantics=("parallel",),                 # megacore-shard the batch
            vmem_limit_bytes=budget,                           # ~48 MiB v7x, ~96 MiB v5e/v6e
        ),
    )(state_flat, action, w1s, w1a, b1, w2, b2, w3, b3)
    return out


def init_params(key, state_dim, action_dim, param_dtype=jnp.bfloat16):
    """nn.Linear-style U(-1/sqrt(fan_in), 1/sqrt(fan_in)) init.
    Weights stored [in, out] (transposed vs. torch), fc1 split into state/action
    halves. Matmul weights bf16; biases and the fc3 row stay f32."""
    in_dim = state_dim + action_dim
    ks = jax.random.split(key, 6)

    def u(k, shape, fan_in):
        bound = 1.0 / (fan_in ** 0.5)
        return jax.random.uniform(k, shape, jnp.float32, -bound, bound)

    w1 = u(ks[0], (in_dim, HIDDEN), in_dim)
    b1 = u(ks[1], (1, HIDDEN), in_dim)
    w2 = u(ks[2], (HIDDEN, HIDDEN), HIDDEN)
    b2 = u(ks[3], (1, HIDDEN), HIDDEN)
    w3 = u(ks[4], (1, HIDDEN), HIDDEN)       # f32 row layout for the VPU reduction
    b3 = u(ks[5], (1,), HIDDEN)              # f32 scalar, lives in SMEM

    w1s = w1[:state_dim].astype(param_dtype)
    w1a = w1[state_dim:].astype(param_dtype)
    return (w1s, w1a, b1, w2.astype(param_dtype), b2, w3, b3)


def critic_reference(state, action, params):
    """Pure-JAX reference with the same (bf16-matmul / f32-accumulate) numerics."""
    w1s, w1a, b1, w2, b2, w3, b3 = params
    B = state.shape[0]
    x = jnp.concatenate([state.reshape(B, -1), action], axis=1).astype(w1s.dtype)
    w1 = jnp.concatenate([w1s, w1a], axis=0)
    h1 = jax.nn.relu(jnp.dot(x, w1, preferred_element_type=jnp.float32) + b1)
    h1 = h1.astype(w2.dtype)
    h2 = jax.nn.relu(jnp.dot(h1, w2, preferred_element_type=jnp.float32) + b2)
    return jnp.sum(h2 * w3, axis=-1, keepdims=True) + b3[0]


if __name__ == "__main__":
    key = jax.random.PRNGKey(0)
    k_state, k_action, k_params = jax.random.split(key, 3)

    # Small shapes consistent with the module:
    #   state  [B=2, C=4, H=2, W=2] -> flattened state_dim = 16
    #   action [B=2, A=4]
    B, C, H, W = 2, 4, 2, 2
    A = 4
    state_dim = C * H * W

    state = jax.random.normal(k_state, (B, C, H, W), jnp.float32)
    action = jax.random.normal(k_action, (B, A), jnp.float32)
    params = init_params(k_params, state_dim, A)

    out = jax.block_until_ready(critic_forward(state, action, params))
    ref = critic_reference(state, action, params)

    assert out.shape == (B, 1), out.shape
    assert jnp.allclose(out, ref, atol=1e-3, rtol=1e-3), (out, ref)

    print("KERNEL_OK")
</pallas_src>

<mosaic_0001>
module attributes {stable_mosaic.version = 11 : i64} {
  func.func @critic_kernel(%arg0: i32, %arg1: memref<8x16xf32, #tpu.memory_space<vmem>>, %arg2: memref<8x4xf32, #tpu.memory_space<vmem>>, %arg3: memref<16x64xbf16, #tpu.memory_space<vmem>>, %arg4: memref<4x64xbf16, #tpu.memory_space<vmem>>, %arg5: memref<1x64xf32, #tpu.memory_space<vmem>>, %arg6: memref<64x64xbf16, #tpu.memory_space<vmem>>, %arg7: memref<1x64xf32, #tpu.memory_space<vmem>>, %arg8: memref<1x64xf32, #tpu.memory_space<vmem>>, %arg9: memref<1xf32, #tpu.memory_space<smem>>, %arg10: memref<8x1xf32, #tpu.memory_space<vmem>>) attributes {dimension_semantics = [#tpu.dimension_semantics<parallel>], iteration_bounds = array<i64: 1>, scalar_prefetch = 0 : i64, scratch_operands = 0 : i64, tpu.core_type = #tpu.core_type<tc>, window_params = [{transform_indices = @transform_0, window_bounds = array<i64: 8, 16>}, {transform_indices = @transform_1, window_bounds = array<i64: 8, 4>}, {pipeline_mode = #tpu.pipeline_mode<synchronous>, transform_indices = @transform_2, window_bounds = array<i64: 16, 64>}, {pipeline_mode = #tpu.pipeline_mode<synchronous>, transform_indices = @transform_3, window_bounds = array<i64: 4, 64>}, {pipeline_mode = #tpu.pipeline_mode<synchronous>, transform_indices = @transform_4, window_bounds = array<i64: 1, 64>}, {pipeline_mode = #tpu.pipeline_mode<synchronous>, transform_indices = @transform_5, window_bounds = array<i64: 64, 64>}, {pipeline_mode = #tpu.pipeline_mode<synchronous>, transform_indices = @transform_6, window_bounds = array<i64: 1, 64>}, {pipeline_mode = #tpu.pipeline_mode<synchronous>, transform_indices = @transform_7, window_bounds = array<i64: 1, 64>}, {transform_indices = @transform_8, window_bounds = array<i64: 1>}, {transform_indices = @transform_9, window_bounds = array<i64: 8, 1>}]} {
    %c0 = arith.constant 0 : index
    %c0_0 = arith.constant 0 : index
    %0 = vector.load %arg1[%c0, %c0_0] : memref<8x16xf32, #tpu.memory_space<vmem>>, vector<8x16xf32>
    %1 = arith.truncf %0 : vector<8x16xf32> to vector<8x16xbf16>
    %c0_1 = arith.constant 0 : index
    %c0_2 = arith.constant 0 : index
    %2 = vector.load %arg2[%c0_1, %c0_2] : memref<8x4xf32, #tpu.memory_space<vmem>>, vector<8x4xf32>
    %3 = arith.truncf %2 : vector<8x4xf32> to vector<8x4xbf16>
    %c0_3 = arith.constant 0 : index
    %c0_4 = arith.constant 0 : index
    %4 = vector.load %arg3[%c0_3, %c0_4] : memref<16x64xbf16, #tpu.memory_space<vmem>>, vector<16x64xbf16>
    %cst = arith.constant dense<0.000000e+00> : vector<8x64xf32>
    %5 = tpu.matmul %1, %4, %cst {dimension_numbers = #tpu.dot_dimension_numbers<[1], [0], [0], [1], [0, 0, 1, 1], [], []>} : vector<8x16xbf16>, vector<16x64xbf16>, vector<8x64xf32> -> vector<8x64xf32>
    %c0_5 = arith.constant 0 : index
    %c0_6 = arith.constant 0 : index
    %6 = vector.load %arg4[%c0_5, %c0_6] : memref<4x64xbf16, #tpu.memory_space<vmem>>, vector<4x64xbf16>
    %cst_7 = arith.constant dense<0.000000e+00> : vector<8x64xf32>
    %7 = tpu.matmul %3, %6, %cst_7 {dimension_numbers = #tpu.dot_dimension_numbers<[1], [0], [0], [1], [0, 0, 1, 1], [], []>} : vector<8x4xbf16>, vector<4x64xbf16>, vector<8x64xf32> -> vector<8x64xf32>
    %8 = arith.addf %5, %7 : vector<8x64xf32>
    %c0_8 = arith.constant 0 : index
    %c0_9 = arith.constant 0 : index
    %9 = vector.load %arg5[%c0_8, %c0_9] : memref<1x64xf32, #tpu.memory_space<vmem>>, vector<1x64xf32>
    %10 = vector.broadcast %9 : vector<1x64xf32> to vector<8x64xf32>
    %11 = arith.addf %8, %10 : vector<8x64xf32>
    %cst_10 = arith.constant 0.000000e+00 : f32
    %12 = vector.broadcast %cst_10 : f32 to vector<8x64xf32>
    %13 = arith.maximumf %11, %12 : vector<8x64xf32>
    %14 = arith.truncf %13 : vector<8x64xf32> to vector<8x64xbf16>
    %c0_11 = arith.constant 0 : index
    %c0_12 = arith.constant 0 : index
    %15 = vector.load %arg6[%c0_11, %c0_12] : memref<64x64xbf16, #tpu.memory_space<vmem>>, vector<64x64xbf16>
    %cst_13 = arith.constant dense<0.000000e+00> : vector<8x64xf32>
    %16 = tpu.matmul %14, %15, %cst_13 {dimension_numbers = #tpu.dot_dimension_numbers<[1], [0], [0], [1], [0, 0, 1, 1], [], []>} : vector<8x64xbf16>, vector<64x64xbf16>, vector<8x64xf32> -> vector<8x64xf32>
    %c0_14 = arith.constant 0 : index
    %c0_15 = arith.constant 0 : index
    %17 = vector.load %arg7[%c0_14, %c0_15] : memref<1x64xf32, #tpu.memory_space<vmem>>, vector<1x64xf32>
    %18 = vector.broadcast %17 : vector<1x64xf32> to vector<8x64xf32>
    %19 = arith.addf %16, %18 : vector<8x64xf32>
    %cst_16 = arith.constant 0.000000e+00 : f32
    %20 = vector.broadcast %cst_16 : f32 to vector<8x64xf32>
    %21 = arith.maximumf %19, %20 : vector<8x64xf32>
    %c0_17 = arith.constant 0 : index
    %c0_18 = arith.constant 0 : index
    %22 = vector.load %arg8[%c0_17, %c0_18] : memref<1x64xf32, #tpu.memory_space<vmem>>, vector<1x64xf32>
    %23 = vector.broadcast %22 : vector<1x64xf32> to vector<8x64xf32>
    %24 = arith.mulf %21, %23 : vector<8x64xf32>
    %cst_19 = arith.constant dense<0.000000e+00> : vector<8xf32>
    %25 = vector.multi_reduction <add>, %24, %cst_19 [1] : vector<8x64xf32> to vector<8xf32>
    %26 = vector.shape_cast %25 : vector<8xf32> to vector<8x1xf32>
    %c0_20 = arith.constant 0 : index
    %27 = memref.load %arg9[%c0_20] : memref<1xf32, #tpu.memory_space<smem>>
    %28 = vector.broadcast %27 : f32 to vector<8x1xf32>
    %29 = arith.addf %26, %28 : vector<8x1xf32>
    %c0_21 = arith.constant 0 : index
    %c0_22 = arith.constant 0 : index
    %30 = vector.load %arg10[%c0_21, %c0_22] : memref<8x1xf32, #tpu.memory_space<vmem>>, vector<8x1xf32>
    tpu.vector_store %arg10[%c0_21, %c0_22], %29 {strides = array<i32>} : memref<8x1xf32, #tpu.memory_space<vmem>>, vector<8x1xf32>,
    return
  }
  func.func @transform_0(%arg0: i32) -> (i32, i32) {
    %c0_i32 = arith.constant 0 : i32
    %c0_i32_0 = arith.constant 0 : i32
    return %arg0, %c0_i32 : i32, i32
  }
  func.func @transform_1(%arg0: i32) -> (i32, i32) {
    %c0_i32 = arith.constant 0 : i32
    %c0_i32_0 = arith.constant 0 : i32
    return %arg0, %c0_i32 : i32, i32
  }
  func.func @transform_2(%arg0: i32) -> (i32, i32) {
    %c0_i32 = arith.constant 0 : i32
    %c0_i32_0 = arith.constant 0 : i32
    %c0_i32_1 = arith.constant 0 : i32
    return %c0_i32, %c0_i32_0 : i32, i32
  }
  func.func @transform_3(%arg0: i32) -> (i32, i32) {
    %c0_i32 = arith.constant 0 : i32
    %c0_i32_0 = arith.constant 0 : i32
    %c0_i32_1 = arith.constant 0 : i32
    return %c0_i32, %c0_i32_0 : i32, i32
  }
  func.func @transform_4(%arg0: i32) -> (i32, i32) {
    %c0_i32 = arith.constant 0 : i32
    %c0_i32_0 = arith.constant 0 : i32
    %c0_i32_1 = arith.constant 0 : i32
    return %c0_i32, %c0_i32_0 : i32, i32
  }
  func.func @transform_5(%arg0: i32) -> (i32, i32) {
    %c0_i32 = arith.constant 0 : i32
    %c0_i32_0 = arith.constant 0 : i32
    %c0_i32_1 = arith.constant 0 : i32
    return %c0_i32, %c0_i32_0 : i32, i32
  }
  func.func @transform_6(%arg0: i32) -> (i32, i32) {
    %c0_i32 = arith.constant 0 : i32
    %c0_i32_0 = arith.constant 0 : i32
    %c0_i32_1 = arith.constant 0 : i32
    return %c0_i32, %c0_i32_0 : i32, i32
  }
  func.func @transform_7(%arg0: i32) -> (i32, i32) {
    %c0_i32 = arith.constant 0 : i32
    %c0_i32_0 = arith.constant 0 : i32
    %c0_i32_1 = arith.constant 0 : i32
    return %c0_i32, %c0_i32_0 : i32, i32
  }
  func.func @transform_8(%arg0: i32) -> i32 {
    %c0_i32 = arith.constant 0 : i32
    %c0_i32_0 = arith.constant 0 : i32
    return %c0_i32 : i32
  }
  func.func @transform_9(%arg0: i32) -> (i32, i32) {
    %c0_i32 = arith.constant 0 : i32
    %c0_i32_0 = arith.constant 0 : i32
    return %arg0, %c0_i32 : i32, i32
  }
}

</mosaic_0001>

<llo_original>
// kernel: tpu_custom_call.1
$region0: #{tpu_custom_call.1}
  #allocation0 [shape = 'u32[]', space=smem, size = 0x4, offset = 0x4, fixed_abs, tag = 'smem constant byte address 0x4 - core index']
  #allocation1 [shape = 'u32[72,128]{1,0:T(1,128)}', space=vmem, size = 0x9000, scoped, tag = 'internal scratch']
  #allocation2 [shape = 'f32[1]{0:T(128)S(6)}', space=smem, size = 0x200, scoped, tag = 'scoped memory for tpu_custom_call.1']
  %s0 = inlined_call_operand.vmem [shape: f32[2,16], index: 0, kind: input, shape index: {}]
  %s1 = inlined_call_operand.hbm [shape: f32[2,4], index: 1, kind: input, shape index: {}]
  %s2 = inlined_call_operand.hbm [shape: bf16[16,64], index: 2, kind: input, shape index: {}]
  %s3 = inlined_call_operand.vmem [shape: bf16[4,64], index: 3, kind: input, shape index: {}]
  %s4 = inlined_call_operand.vmem [shape: f32[1,64], index: 4, kind: input, shape index: {}]
  %s5 = inlined_call_operand.hbm [shape: bf16[64,64], index: 5, kind: input, shape index: {}]
  %s6 = inlined_call_operand.vmem [shape: f32[1,64], index: 6, kind: input, shape index: {}]
  %s7 = inlined_call_operand.vmem [shape: f32[1,64], index: 7, kind: input, shape index: {}]
  %s8 = inlined_call_operand.<no memory space> [shape: f32[1], index: 8, kind: input, shape index: {}]
  %s9 = inlined_call_operand.vmem [shape: f32[2,1], index: 9, kind: output, shape index: {}]
  %s10 = sld [smem:[#allocation0]]
  $region88: #{tpu_custom_call.1} parent=0
    _
  %s12 = ssub.s32 1, %s10
  %s13 = scalar_select 0, %s12, %s10
  %14 = sst [smem:[#allocation2]] %s8
  $region1: #{tpu_custom_call.1} parent=0
    #allocation3 [shape = 'u8[4096]{0}', space=vmem, size = 0x1000, scoped, tag = 'input window, operand 1, single buffered']
    #allocation4 [shape = 's32[1]{0}', space=sflag, size = 0x4, scoped, tag = 'scoped memory for tpu_custom_call.1']
    #allocation5 [shape = 'u8[4096]{0}', space=vmem, size = 0x1000, scoped, tag = 'input window, operand 2, single buffered']
    #allocation6 [shape = 's32[1]{0}', space=sflag, size = 0x4, scoped, tag = 'scoped memory for tpu_custom_call.1']
    #allocation7 [shape = 'u8[16384]{0}', space=vmem, size = 0x4000, scoped, tag = 'input window, operand 5, single buffered']
    #allocation8 [shape = 'u8[4096]{0}', space=vmem, size = 0x1000, scoped, tag = 'output window, operand 0, single buffered']
    %15 = vsyncpa [#allocation4], 0
    %16 = vsyncpa [#allocation6], 0
    // Predicated region
    $region2: #{tpu_custom_call.1} parent=1 // pred_check
      _
    $region3: #{tpu_custom_call.1} parent=1 // pred_check_branch
      %18 = sbr.rel (0) target = $region5
    $region4: #{tpu_custom_call.1} parent=1 // pred_region
      _
    $region5: #{tpu_custom_call.1} parent=1 // pred_fallthru
      _
    // Predicated region
    $region6: #{tpu_custom_call.1} parent=1 // pred_check
      _
    $region7: #{tpu_custom_call.1} parent=1 // pred_check_branch
      %20 = sbr.rel (0) target = $region9
    $region8: #{tpu_custom_call.1} parent=1 // pred_region
      %22 = vsyncadd [#allocation4], 96
      %s23 = sshll.u32 %s1, 4
      %s24 = int_to_ptr.hbm [resolvable:$true] %s23
      %s25 = sshll.u32 [#allocation3], 4
      %s26 = int_to_ptr.vmem [resolvable:$true] %s25
      %31 = dma.hbm_to_vmem [thread:$0]  %s24, 32, %s26, [#allocation4], 32, 32, 2
    $region9: #{tpu_custom_call.1} parent=1 // pred_fallthru
      _
    // Predicated region
    $region10: #{tpu_custom_call.1} parent=1 // pred_check
      _
    $region11: #{tpu_custom_call.1} parent=1 // pred_check_branch
      %33 = sbr.rel (0) target = $region13
    $region12: #{tpu_custom_call.1} parent=1 // pred_region
      %35 = vsyncadd [#allocation6], 0
      %s36 = sshll.u32 %s2, 4
      %s37 = int_to_ptr.hbm [resolvable:$true] %s36
      %s38 = sshll.u32 [#allocation5], 4
      %s39 = int_to_ptr.vmem [resolvable:$true] %s38
      %44 = dma.hbm_to_vmem [thread:$0]  %s37, 128, %s39, [#allocation6], 64, 64, 4
    $region13: #{tpu_custom_call.1} parent=1 // pred_fallthru
      _
    // Predicated region
    $region14: #{tpu_custom_call.1} parent=1 // pred_check
      _
    $region15: #{tpu_custom_call.1} parent=1 // pred_check_branch
      %46 = sbr.rel (0) target = $region17
    $region16: #{tpu_custom_call.1} parent=1 // pred_region
      _
    $region17: #{tpu_custom_call.1} parent=1 // pred_fallthru
      _
    // Predicated region
    $region18: #{tpu_custom_call.1} parent=1 // pred_check
      _
    $region19: #{tpu_custom_call.1} parent=1 // pred_check_branch
      %48 = sbr.rel (0) target = $region21
    $region20: #{tpu_custom_call.1} parent=1 // pred_region
      _
    $region21: #{tpu_custom_call.1} parent=1 // pred_fallthru
      _
    // Predicated region
    $region22: #{tpu_custom_call.1} parent=1 // pred_check
      _
    $region23: #{tpu_custom_call.1} parent=1 // pred_check_branch
      %50 = sbr.rel (0) target = $region25
    $region24: #{tpu_custom_call.1} parent=1 // pred_region
      %52 = vsyncadd [#allocation6], 0
      %s53 = sshll.u32 %s5, 4
      %s54 = int_to_ptr.hbm [resolvable:$true] %s53
      %s55 = sshll.u32 [#allocation7], 4
      %s56 = int_to_ptr.vmem [resolvable:$true] %s55
      %61 = dma.hbm_to_vmem [thread:$0]  %s54, 512, %s56, [#allocation6], 64, 64, 4
    $region25: #{tpu_custom_call.1} parent=1 // pred_fallthru
      _
    // Predicated region
    $region26: #{tpu_custom_call.1} parent=1 // pred_check
      _
    $region27: #{tpu_custom_call.1} parent=1 // pred_check_branch
      %63 = sbr.rel (0) target = $region29
    $region28: #{tpu_custom_call.1} parent=1 // pred_region
      _
    $region29: #{tpu_custom_call.1} parent=1 // pred_fallthru
      _
    // Predicated region
    $region30: #{tpu_custom_call.1} parent=1 // pred_check
      _
    $region31: #{tpu_custom_call.1} parent=1 // pred_check_branch
      %65 = sbr.rel (0) target = $region33
    $region32: #{tpu_custom_call.1} parent=1 // pred_region
      _
    $region33: #{tpu_custom_call.1} parent=1 // pred_fallthru
      _
    // Predicated region
    $region34: #{tpu_custom_call.1} parent=1 // pred_check
      _
    $region35: #{tpu_custom_call.1} parent=1 // pred_check_branch
      %67 = sbr.rel (0) target = $region37
    $region36: #{tpu_custom_call.1} parent=1 // pred_region
      _
    $region37: #{tpu_custom_call.1} parent=1 // pred_fallthru
      _
    // Predicated region
    $region38: #{tpu_custom_call.1} parent=1 // pred_check
      _
    $region39: #{tpu_custom_call.1} parent=1 // pred_check_branch
      %69 = sbr.rel (0) target = $region41
    $region40: #{tpu_custom_call.1} parent=1 // pred_region
      %71 = dma.done [#allocation4], 128
    $region41: #{tpu_custom_call.1} parent=1 // pred_fallthru
      _
    // Predicated region
    $region42: #{tpu_custom_call.1} parent=1 // pred_check
      _
    $region43: #{tpu_custom_call.1} parent=1 // pred_check_branch
      %73 = sbr.rel (0) target = $region45
    $region44: #{tpu_custom_call.1} parent=1 // pred_region
      %75 = dma.done [#allocation6], 128
    $region45: #{tpu_custom_call.1} parent=1 // pred_fallthru
      _
    // Predicated region
    $region46: #{tpu_custom_call.1} parent=1 // pred_check
      _
    $region47: #{tpu_custom_call.1} parent=1 // pred_check_branch
      %77 = sbr.rel (0) target = $region49
    $region48: #{tpu_custom_call.1} parent=1 // pred_region
      %79 = dma.done [#allocation6], 512
    $region49: #{tpu_custom_call.1} parent=1 // pred_fallthru
      _
    %v81 = vld [vmem:[%s0] sm:$0xff]
    %v82 = vpack.c.bf16 %v81, %v81
    %v83 = vld [vmem:[#allocation3] sm:$0xff]
    %v84 = vpack.c.bf16 %v83, %v83
    %v85 = vld [vmem:[#allocation5] sm:$0xf]
    %v86 = vld [vmem:[#allocation5 + $0x4] sm:$0xf]
    %v87 = vld [vmem:[%s3] sm:$0x3]
    %vm88 = vcmask 31744
    %v90 = vsel %vm88, %v84, 0
    %vm92 = vcmask 1041408
    %v94 = vsel %vm92, %v87, 0
    %96 = vmatpush.bf16.msra.mxu0 0
    %97 = vmatpush.bf16.msra.mxu0 0
    %98 = vmatpush.bf16.msra.mxu0 0
    %99 = vmatpush.bf16.msra.mxu0 0
    %100 = vmatpush.bf16.msra.mxu0 0
    %101 = vmatpush.bf16.msra.mxu0 0
    %102 = vmatpush.bf16.msra.mxu0 0
    %103 = vmatpush.bf16.msra.mxu0 %v94
    %104 = vmatmul.bf16.gmra.mxu0 %v90
    %v105 = vpop.f32.mrf.mxu0
    %v106 = vadd.f32 0.0, %v105
    %v107 = vpop.f32.mrf.mxu0
    %108 = vdwg.mxu0
    %v111 = vunpack.c.l.b16 %v85
    %v112 = vunpack.c.l.b16 %v86
    %v113 = vpack.c.b16 %v112, %v111
    %vm115 = vcmask 130048
    %v117 = vsel %vm115, %v82, 0
    %119 = vmatpush.bf16.msra.mxu0 0
    %120 = vmatpush.bf16.msra.mxu0 0
    %121 = vmatpush.bf16.msra.mxu0 0
    %122 = vmatpush.bf16.msra.mxu0 0
    %123 = vmatpush.bf16.msra.mxu0 0
    %124 = vmatpush.bf16.msra.mxu0 0
    %125 = vmatpush.bf16.msra.mxu0 0
    %126 = vmatpush.bf16.msra.mxu0 %v113
    %127 = vmatmul.bf16.gmra.mxu0 %v117
    %v128 = vpop.f32.mrf.mxu0
    %v129 = vadd.f32 %v106, %v128
    %v130 = vpop.f32.mrf.mxu0
    %131 = vdwg.mxu0
    %v132 = vld [vmem:[%s4] sm:$0x1]
    %v134 = vperm.slane %v132, 0
    %v136 = vadd.f32 %v129, %v134
    %v137 = vmax.f32 %v136, 0.0
    %v138 = vpack.c.bf16 %v137, %v137
    %v139 = vld [vmem:[#allocation7] sm:$0xf]
    %v140 = vld [vmem:[#allocation7 + $0x4] sm:$0xf]
    %v141 = vld [vmem:[#allocation7 + $0x8] sm:$0xf]
    %v142 = vld [vmem:[#allocation7 + $0xc] sm:$0xf]
    %v143 = vld [vmem:[#allocation7 + $0x10] sm:$0xf]
    %v144 = vld [vmem:[#allocation7 + $0x14] sm:$0xf]
    %v145 = vld [vmem:[#allocation7 + $0x18] sm:$0xf]
    %v146 = vld [vmem:[#allocation7 + $0x1c] sm:$0xf]
    %v147 = vld [vmem:[%s6] sm:$0x1]
    %v149 = vperm.slane %v147, 0
    %v159 = vunpack.c.l.b16 %v139
    %v160 = vunpack.c.l.b16 %v140
    %v161 = vunpack.c.l.b16 %v141
    %v162 = vunpack.c.l.b16 %v142
    %v163 = vunpack.c.l.b16 %v143
    %v164 = vunpack.c.l.b16 %v144
    %v165 = vunpack.c.l.b16 %v145
    %v166 = vunpack.c.l.b16 %v146
    %v167 = vpack.c.b16 %v160, %v159
    %v168 = vpack.c.b16 %v162, %v161
    %v169 = vpack.c.b16 %v164, %v163
    %v170 = vpack.c.b16 %v166, %v165
    %vm175 = vcmask 523264
    %v177 = vsel %vm175, %v138, 0
    %179 = vmatpush.bf16.msra.mxu0 0
    %180 = vmatpush.bf16.msra.mxu0 0
    %181 = vmatpush.bf16.msra.mxu0 0
    %182 = vmatpush.bf16.msra.mxu0 0
    %183 = vmatpush.bf16.msra.mxu0 %v170
    %184 = vmatpush.bf16.msra.mxu0 %v169
    %185 = vmatpush.bf16.msra.mxu0 %v168
    %186 = vmatpush.bf16.msra.mxu0 %v167
    %187 = vmatmul.bf16.gmra.mxu0 %v177
    %v188 = vpop.f32.mrf.mxu0
    %v189 = vadd.f32 %v149, %v188
    %v190 = vpop.f32.mrf.mxu0
    %191 = vdwg.mxu0
    %v192 = vmax.f32 %v189, 0.0
    %v193 = vld [vmem:[%s7] sm:$0x1]
    %v195 = vperm.slane %v193, 0
    %v197 = vmul.f32 %v192, %v195
    %v198 = vsel %vm175, %v197, 0.0
    %199 = vadd.xlane.f32.xlu0 %v198
    %v200 = vpop.xlane.xlu0 %199
    %s201 = sld [smem:[#allocation2]]
    %v202 = vstv %s201
    %v203 = vadd.f32 %v200, %v202
    %vm204 = vcmask 7168
    %205 = vst.msk [vmem:[#allocation8] sm:$0xff] %vm204, %v203
    // Predicated region
    $region50: #{tpu_custom_call.1} parent=1 // pred_check
      _
    $region51: #{tpu_custom_call.1} parent=1 // pred_check_branch
      %207 = sbr.rel (0) target = $region53
    $region52: #{tpu_custom_call.1} parent=1 // pred_region
      // Predicated region
      $region54: #{tpu_custom_call.1} parent=52 // pred_check
        _
      $region55: #{tpu_custom_call.1} parent=52 // pred_check_branch
        %209 = sbr.rel (0) target = $region57
      $region56: #{tpu_custom_call.1} parent=52 // pred_region
        // Predicated region
        $region58: #{tpu_custom_call.1} parent=56 // pred_check
          _
        $region59: #{tpu_custom_call.1} parent=56 // pred_check_branch
          %211 = sbr.rel target = $region61
        $region60: #{tpu_custom_call.1} parent=56 // pred_region
          // Predicated region
          $region73: #{tpu_custom_call.1} parent=60 // pred_check
            _
          $region74: #{tpu_custom_call.1} parent=60 // pred_check_branch
            %227 = sbr.rel (0) target = $region76
          $region75: #{tpu_custom_call.1} parent=60 // pred_region
            %s229 = ssub.s32 4, 1
            loop: start=0, step=1, limit=1
            $region77: #{tpu_custom_call.1} parent=75 // loop_pre_header
              _
            $region78: #{tpu_custom_call.1} parent=75 // loop_header
              %s231 = sphi 0, %s235
              %p232 = scmp.ge.s32.totalorder %s231, 1
              %s236 = sphi [#allocation8], [#allocation8]
              %s237 = sphi %s9, %s9
            $region79: #{tpu_custom_call.1} parent=75 // loop_header_branch
              %234 = sbr.rel (%p232) target = $region83
            $region80: #{tpu_custom_call.1} parent=75 // loop_body
              %v238 = vld [vmem:[%s236] sm:%s229]
              %239 = vst [vmem:[%s237] sm:%s229] %v238
            $region81: #{tpu_custom_call.1} parent=75 // loop_footer
              %s235 = sadd.s32 1, %s231
            $region82: #{tpu_custom_call.1} parent=75 // loop_footer_branch
              %230 = sbr.rel target = $region78
            $region83: #{tpu_custom_call.1} parent=75 // loop_exit
              _
          $region76: #{tpu_custom_call.1} parent=60 // pred_fallthru
            _
        $region61: #{tpu_custom_call.1} parent=56 // pred_fallthru
          _
        // Predicated region
        $region62: #{tpu_custom_call.1} parent=56 // pred_check
          _
        $region63: #{tpu_custom_call.1} parent=56 // pred_check_branch
          %213 = sbr.rel (0) target = $region65
        $region64: #{tpu_custom_call.1} parent=56 // pred_region
          %s215 = ssub.s32 4, 1
          loop: start=0, step=1, limit=1
          $region66: #{tpu_custom_call.1} parent=64 // loop_pre_header
            _
          $region67: #{tpu_custom_call.1} parent=64 // loop_header
            %s217 = sphi 0, %s221
            %p218 = scmp.ge.s32.totalorder %s217, 1
            %s222 = sphi [#allocation8], [#allocation8]
            %s223 = sphi %s9, %s9
          $region68: #{tpu_custom_call.1} parent=64 // loop_header_branch
            %220 = sbr.rel (%p218) target = $region72
          $region69: #{tpu_custom_call.1} parent=64 // loop_body
            %v224 = vld [vmem:[%s222] sm:%s215]
            %225 = vst [vmem:[%s223] sm:%s215] %v224
          $region70: #{tpu_custom_call.1} parent=64 // loop_footer
            %s221 = sadd.s32 1, %s217
          $region71: #{tpu_custom_call.1} parent=64 // loop_footer_branch
            %216 = sbr.rel target = $region67
          $region72: #{tpu_custom_call.1} parent=64 // loop_exit
            _
        $region65: #{tpu_custom_call.1} parent=56 // pred_fallthru
          _
      $region57: #{tpu_custom_call.1} parent=52 // pred_fallthru
        _
      %240 = vnop
    $region53: #{tpu_custom_call.1} parent=1 // pred_fallthru
      _
    // Predicated region
    $region84: #{tpu_custom_call.1} parent=1 // pred_check
      _
    $region85: #{tpu_custom_call.1} parent=1 // pred_check_branch
      %242 = sbr.rel (0) target = $region87
    $region86: #{tpu_custom_call.1} parent=1 // pred_region
      _
    $region87: #{tpu_custom_call.1} parent=1 // pred_fallthru
      _
    %243 = vsyncpa [#allocation4], 1
    %244 = vsyncpa [#allocation6], 1

</llo_original>
